<compile_context>
chip_gen: v6e
topology: v6e:2x2x1
jax: 0.10.0
libtpu: 0.0.40
codegen_flags: <defaults>
</compile_context>

<pallas_src>
import functools

import jax
import jax.numpy as jnp
from jax.experimental import pallas as pl
from jax.experimental.pallas import tpu as pltpu


def _round_up(x, m):
    return ((x + m - 1) // m) * m


def _choose_block_rows(B, kd, elem_bytes, block_rows=None):
    """Pick the row-tile size tb (multiple of 8) from a VMEM budget."""
    kd_lanes = _round_up(kd, 128)
    # Per-row VMEM per pipeline step: a+b blocks (double-buffered, native dtype)
    # plus the lane-padded (tb, 1) target/output tiles (f32, double-buffered).
    bytes_per_row = 2 * 2 * kd_lanes * elem_bytes + 2 * 2 * 128 * 4
    budget = 20 << 20  # pipeline buffers; headroom under the 32 MiB scoped limit
    tb = max(8, (budget // bytes_per_row) // 8 * 8)
    if block_rows is not None:
        tb = max(8, _round_up(int(block_rows), 8))
    # Keep >= 2 grid steps so dimension_semantics=("parallel",) can split the
    # row axis across v7x's two TensorCores.
    tb = min(tb, max(8, _round_up(pl.cdiv(B, 2), 8)))
    tb = min(tb, _round_up(B, 8))
    if tb > B:
        tb = B  # full-batch block: block dim == array dim satisfies tiling rules
    return tb


def _siamese_loss_kernel(a_ref, b_ref, t_ref, w_ref, bias_ref, out_ref, *, K, D):
    # a_ref/b_ref: (tb, K*D) lane-dense   t_ref: (tb, 1)
    # w_ref: (1, D) VMEM                  bias_ref: (1,) SMEM scalar
    # out_ref: (tb, 1) per-row BCE-with-logits losses
    #
    # ||a - b||_2 over the K axis, as an unrolled lane-slice accumulation so the
    # HBM/VMEM blocks stay lane-dense even when D < 128.
    def chunk(k):
        lo = k * D
        d = (a_ref[:, lo:lo + D].astype(jnp.float32)
             - b_ref[:, lo:lo + D].astype(jnp.float32))
        return d * d

    acc = chunk(0)
    for k in range(1, K):
        acc = acc + chunk(k)
    dist = jnp.sqrt(acc)                                            # (tb, D)

    # nn.Linear(D, 1): lane-axis multiply + reduce (no transpose, no MXU pass).
    w = w_ref[...].astype(jnp.float32)                              # (1, D)
    logits = jnp.sum(dist * w, axis=-1, keepdims=True) + bias_ref[0]  # (tb, 1)

    # Numerically-stable BCEWithLogits (PyTorch formulation):
    #   max(x, 0) - x*t + log(1 + exp(-|x|))
    t = t_ref[...]                                                  # (tb, 1) f32
    out_ref[...] = (
        jnp.maximum(logits, 0.0) - logits * t + jnp.log1p(jnp.exp(-jnp.abs(logits)))
    )


def siamese_loss(a, b, target, weight, bias, *, block_rows=None):
    """a, b: (B, K, D); target: (B,) or (B, 1) in {0,1}; weight: (1, D); bias: (1,).

    Returns the scalar BCEWithLogitsLoss(mean) of Linear(D,1)(||a-b||_2 over dim 1).
    """
    B, K, D = a.shape
    assert b.shape == (B, K, D), (a.shape, b.shape)
    kd = K * D

    # Metadata-only reshape: lane-dense (B, K*D) blocks avoid 128-lane padding
    # of (tb, K, D) tiles when D < 128.  No HBM copy, no dtype change of a/b.
    a2 = a.reshape(B, kd)
    b2 = b.reshape(B, kd)
    target = jnp.asarray(target, jnp.float32).reshape(B, 1)
    weight = jnp.asarray(weight).reshape(1, D)
    bias = jnp.asarray(bias, jnp.float32).reshape(1)

    elem = jnp.dtype(a.dtype).itemsize
    tb = _choose_block_rows(B, kd, elem, block_rows)
    grid = (pl.cdiv(B, tb),)

    cost = pl.CostEstimate(
        flops=3 * B * kd + 3 * B * D + 5 * B,          # diff/sq/add + dot + BCE
        transcendentals=B * D + 2 * B,                 # sqrt + exp + log per row
        bytes_accessed=2 * B * kd * elem + 3 * B * 4,  # a + b + target + per-row out
    )

    per_row = pl.pallas_call(
        functools.partial(_siamese_loss_kernel, K=K, D=D),
        out_shape=jax.ShapeDtypeStruct((B, 1), jnp.float32),
        grid=grid,
        in_specs=[
            pl.BlockSpec((tb, kd), lambda i: (i, 0)),   # a row-block (lane-dense)
            pl.BlockSpec((tb, kd), lambda i: (i, 0)),   # b row-block (lane-dense)
            pl.BlockSpec((tb, 1), lambda i: (i, 0)),    # target row-block
            pl.BlockSpec((1, D), lambda i: (0, 0)),     # weight (replicated)
            pl.BlockSpec(memory_space=pltpu.MemorySpace.SMEM),  # bias scalar
        ],
        out_specs=pl.BlockSpec((tb, 1), lambda i: (i, 0)),
        compiler_params=pltpu.CompilerParams(
            dimension_semantics=("parallel",),
            vmem_limit_bytes=32 * 1024 * 1024,
        ),
        cost_estimate=cost,
    )(a2, b2, target, weight, bias)

    # BCEWithLogitsLoss default reduction="mean" over the B logits.  Out-of-range
    # rows of the ragged last block were clipped on writeback, so per_row holds
    # exactly the B valid losses.
    return jnp.mean(per_row)


if __name__ == "__main__":
    key = jax.random.PRNGKey(0)
    k1, k2, k3, k4, k5 = jax.random.split(key, 5)

    B, K, D = 16, 8, 32
    a = jax.random.normal(k1, (B, K, D), dtype=jnp.float32)
    bb = jax.random.normal(k2, (B, K, D), dtype=jnp.float32)
    target = (jax.random.uniform(k3, (B, 1)) > 0.5).astype(jnp.float32)
    weight = jax.random.normal(k4, (1, D), dtype=jnp.float32) / jnp.sqrt(D)
    bias = jax.random.normal(k5, (1,), dtype=jnp.float32)

    loss = siamese_loss(a, bb, target, weight, bias)
    jax.block_until_ready(loss)

    # Pure-JAX reference of the same forward pass.
    dist = jnp.sqrt(jnp.sum((a - bb) ** 2, axis=1))            # (B, D)
    logits = dist @ weight.T + bias                            # (B, 1)
    ref = jnp.mean(
        jnp.maximum(logits, 0.0)
        - logits * target
        + jnp.log1p(jnp.exp(-jnp.abs(logits)))
    )
    assert jnp.allclose(loss, ref, rtol=1e-5, atol=1e-5), (loss, ref)

    print("KERNEL_OK")
</pallas_src>

<mosaic_0001>
module attributes {stable_mosaic.version = 11 : i64} {
  func.func @_siamese_loss_kernel(%arg0: i32, %arg1: memref<8x256xf32, #tpu.memory_space<vmem>>, %arg2: memref<8x256xf32, #tpu.memory_space<vmem>>, %arg3: memref<8x1xf32, #tpu.memory_space<vmem>>, %arg4: memref<1x32xf32, #tpu.memory_space<vmem>>, %arg5: memref<1xf32, #tpu.memory_space<smem>>, %arg6: memref<8x1xf32, #tpu.memory_space<vmem>>) attributes {dimension_semantics = [#tpu.dimension_semantics<parallel>], iteration_bounds = array<i64: 2>, scalar_prefetch = 0 : i64, scratch_operands = 0 : i64, tpu.core_type = #tpu.core_type<tc>, window_params = [{transform_indices = @transform_0, window_bounds = array<i64: 8, 256>}, {transform_indices = @transform_1, window_bounds = array<i64: 8, 256>}, {transform_indices = @transform_2, window_bounds = array<i64: 8, 1>}, {pipeline_mode = #tpu.pipeline_mode<synchronous>, transform_indices = @transform_3, window_bounds = array<i64: 1, 32>}, {transform_indices = @transform_4, window_bounds = array<i64: 1>}, {transform_indices = @transform_5, window_bounds = array<i64: 8, 1>}]} {
    %c0 = arith.constant 0 : index
    %c0_0 = arith.constant 0 : index
    %0 = vector.load %arg1[%c0, %c0_0] : memref<8x256xf32, #tpu.memory_space<vmem>>, vector<8x32xf32>
    %c0_1 = arith.constant 0 : index
    %c0_2 = arith.constant 0 : index
    %1 = vector.load %arg2[%c0_1, %c0_2] : memref<8x256xf32, #tpu.memory_space<vmem>>, vector<8x32xf32>
    %2 = arith.subf %0, %1 : vector<8x32xf32>
    %3 = arith.mulf %2, %2 : vector<8x32xf32>
    %c0_3 = arith.constant 0 : index
    %c32 = arith.constant 32 : index
    %4 = vector.load %arg1[%c0_3, %c32] : memref<8x256xf32, #tpu.memory_space<vmem>>, vector<8x32xf32>
    %c0_4 = arith.constant 0 : index
    %c32_5 = arith.constant 32 : index
    %5 = vector.load %arg2[%c0_4, %c32_5] : memref<8x256xf32, #tpu.memory_space<vmem>>, vector<8x32xf32>
    %6 = arith.subf %4, %5 : vector<8x32xf32>
    %7 = arith.mulf %6, %6 : vector<8x32xf32>
    %8 = arith.addf %3, %7 : vector<8x32xf32>
    %c0_6 = arith.constant 0 : index
    %c64 = arith.constant 64 : index
    %9 = vector.load %arg1[%c0_6, %c64] : memref<8x256xf32, #tpu.memory_space<vmem>>, vector<8x32xf32>
    %c0_7 = arith.constant 0 : index
    %c64_8 = arith.constant 64 : index
    %10 = vector.load %arg2[%c0_7, %c64_8] : memref<8x256xf32, #tpu.memory_space<vmem>>, vector<8x32xf32>
    %11 = arith.subf %9, %10 : vector<8x32xf32>
    %12 = arith.mulf %11, %11 : vector<8x32xf32>
    %13 = arith.addf %8, %12 : vector<8x32xf32>
    %c0_9 = arith.constant 0 : index
    %c96 = arith.constant 96 : index
    %14 = vector.load %arg1[%c0_9, %c96] : memref<8x256xf32, #tpu.memory_space<vmem>>, vector<8x32xf32>
    %c0_10 = arith.constant 0 : index
    %c96_11 = arith.constant 96 : index
    %15 = vector.load %arg2[%c0_10, %c96_11] : memref<8x256xf32, #tpu.memory_space<vmem>>, vector<8x32xf32>
    %16 = arith.subf %14, %15 : vector<8x32xf32>
    %17 = arith.mulf %16, %16 : vector<8x32xf32>
    %18 = arith.addf %13, %17 : vector<8x32xf32>
    %c0_12 = arith.constant 0 : index
    %c128 = arith.constant 128 : index
    %19 = vector.load %arg1[%c0_12, %c128] : memref<8x256xf32, #tpu.memory_space<vmem>>, vector<8x32xf32>
    %c0_13 = arith.constant 0 : index
    %c128_14 = arith.constant 128 : index
    %20 = vector.load %arg2[%c0_13, %c128_14] : memref<8x256xf32, #tpu.memory_space<vmem>>, vector<8x32xf32>
    %21 = arith.subf %19, %20 : vector<8x32xf32>
    %22 = arith.mulf %21, %21 : vector<8x32xf32>
    %23 = arith.addf %18, %22 : vector<8x32xf32>
    %c0_15 = arith.constant 0 : index
    %c160 = arith.constant 160 : index
    %24 = vector.load %arg1[%c0_15, %c160] : memref<8x256xf32, #tpu.memory_space<vmem>>, vector<8x32xf32>
    %c0_16 = arith.constant 0 : index
    %c160_17 = arith.constant 160 : index
    %25 = vector.load %arg2[%c0_16, %c160_17] : memref<8x256xf32, #tpu.memory_space<vmem>>, vector<8x32xf32>
    %26 = arith.subf %24, %25 : vector<8x32xf32>
    %27 = arith.mulf %26, %26 : vector<8x32xf32>
    %28 = arith.addf %23, %27 : vector<8x32xf32>
    %c0_18 = arith.constant 0 : index
    %c192 = arith.constant 192 : index
    %29 = vector.load %arg1[%c0_18, %c192] : memref<8x256xf32, #tpu.memory_space<vmem>>, vector<8x32xf32>
    %c0_19 = arith.constant 0 : index
    %c192_20 = arith.constant 192 : index
    %30 = vector.load %arg2[%c0_19, %c192_20] : memref<8x256xf32, #tpu.memory_space<vmem>>, vector<8x32xf32>
    %31 = arith.subf %29, %30 : vector<8x32xf32>
    %32 = arith.mulf %31, %31 : vector<8x32xf32>
    %33 = arith.addf %28, %32 : vector<8x32xf32>
    %c0_21 = arith.constant 0 : index
    %c224 = arith.constant 224 : index
    %34 = vector.load %arg1[%c0_21, %c224] : memref<8x256xf32, #tpu.memory_space<vmem>>, vector<8x32xf32>
    %c0_22 = arith.constant 0 : index
    %c224_23 = arith.constant 224 : index
    %35 = vector.load %arg2[%c0_22, %c224_23] : memref<8x256xf32, #tpu.memory_space<vmem>>, vector<8x32xf32>
    %36 = arith.subf %34, %35 : vector<8x32xf32>
    %37 = arith.mulf %36, %36 : vector<8x32xf32>
    %38 = arith.addf %33, %37 : vector<8x32xf32>
    %39 = math.sqrt %38 : vector<8x32xf32>
    %c0_24 = arith.constant 0 : index
    %c0_25 = arith.constant 0 : index
    %40 = vector.load %arg4[%c0_24, %c0_25] : memref<1x32xf32, #tpu.memory_space<vmem>>, vector<1x32xf32>
    %41 = vector.broadcast %40 : vector<1x32xf32> to vector<8x32xf32>
    %42 = arith.mulf %39, %41 : vector<8x32xf32>
    %cst = arith.constant dense<0.000000e+00> : vector<8xf32>
    %43 = vector.multi_reduction <add>, %42, %cst [1] : vector<8x32xf32> to vector<8xf32>
    %44 = vector.shape_cast %43 : vector<8xf32> to vector<8x1xf32>
    %c0_26 = arith.constant 0 : index
    %45 = memref.load %arg5[%c0_26] : memref<1xf32, #tpu.memory_space<smem>>
    %46 = vector.broadcast %45 : f32 to vector<8x1xf32>
    %47 = arith.addf %44, %46 : vector<8x1xf32>
    %c0_27 = arith.constant 0 : index
    %c0_28 = arith.constant 0 : index
    %48 = vector.load %arg3[%c0_27, %c0_28] : memref<8x1xf32, #tpu.memory_space<vmem>>, vector<8x1xf32>
    %cst_29 = arith.constant 0.000000e+00 : f32
    %49 = vector.broadcast %cst_29 : f32 to vector<8x1xf32>
    %50 = arith.maximumf %47, %49 : vector<8x1xf32>
    %51 = arith.mulf %47, %48 : vector<8x1xf32>
    %52 = arith.subf %50, %51 : vector<8x1xf32>
    %53 = math.absf %47 : vector<8x1xf32>
    %cst_30 = arith.constant 0.000000e+00 : f32
    %54 = vector.broadcast %cst_30 : f32 to vector<8x1xf32>
    %55 = arith.subf %54, %53 : vector<8x1xf32>
    %56 = math.exp %55 : vector<8x1xf32>
    %57 = math.log1p %56 : vector<8x1xf32>
    %58 = arith.addf %52, %57 : vector<8x1xf32>
    %c0_31 = arith.constant 0 : index
    %c0_32 = arith.constant 0 : index
    %59 = vector.load %arg6[%c0_31, %c0_32] : memref<8x1xf32, #tpu.memory_space<vmem>>, vector<8x1xf32>
    tpu.vector_store %arg6[%c0_31, %c0_32], %58 {strides = array<i32>} : memref<8x1xf32, #tpu.memory_space<vmem>>, vector<8x1xf32>,
    return
  }
  func.func @transform_0(%arg0: i32) -> (i32, i32) {
    %c0_i32 = arith.constant 0 : i32
    %c0_i32_0 = arith.constant 0 : i32
    return %arg0, %c0_i32 : i32, i32
  }
  func.func @transform_1(%arg0: i32) -> (i32, i32) {
    %c0_i32 = arith.constant 0 : i32
    %c0_i32_0 = arith.constant 0 : i32
    return %arg0, %c0_i32 : i32, i32
  }
  func.func @transform_2(%arg0: i32) -> (i32, i32) {
    %c0_i32 = arith.constant 0 : i32
    %c0_i32_0 = arith.constant 0 : i32
    return %arg0, %c0_i32 : i32, i32
  }
  func.func @transform_3(%arg0: i32) -> (i32, i32) {
    %c0_i32 = arith.constant 0 : i32
    %c0_i32_0 = arith.constant 0 : i32
    %c0_i32_1 = arith.constant 0 : i32
    return %c0_i32, %c0_i32_0 : i32, i32
  }
  func.func @transform_4(%arg0: i32) -> i32 {
    %c0_i32 = arith.constant 0 : i32
    %c0_i32_0 = arith.constant 0 : i32
    return %c0_i32 : i32
  }
  func.func @transform_5(%arg0: i32) -> (i32, i32) {
    %c0_i32 = arith.constant 0 : i32
    %c0_i32_0 = arith.constant 0 : i32
    return %arg0, %c0_i32 : i32, i32
  }
}

</mosaic_0001>

<llo_original>
// kernel: tpu_custom_call.1
$region0: #{tpu_custom_call.1}
  #allocation0 [shape = 'u32[]', space=smem, size = 0x4, offset = 0x4, fixed_abs, tag = 'smem constant byte address 0x4 - core index']
  #allocation1 [shape = 'u32[144,128]{1,0:T(1,128)}', space=vmem, size = 0x12000, scoped, tag = 'internal scratch']
  #allocation2 [shape = 'f32[1]{0:T(128)S(6)}', space=smem, size = 0x200, scoped, tag = 'scoped memory for tpu_custom_call.1']
  %s0 = inlined_call_operand.hbm [shape: f32[16,256], index: 0, kind: input, shape index: {}]
  %s1 = inlined_call_operand.hbm [shape: f32[16,256], index: 1, kind: input, shape index: {}]
  %s2 = inlined_call_operand.vmem [shape: f32[16,1], index: 2, kind: input, shape index: {}]
  %s3 = inlined_call_operand.vmem [shape: f32[1,32], index: 3, kind: input, shape index: {}]
  %s4 = inlined_call_operand.<no memory space> [shape: f32[1], index: 4, kind: input, shape index: {}]
  %s5 = inlined_call_operand.vmem [shape: f32[16,1], index: 5, kind: output, shape index: {}]
  %s6 = sld [smem:[#allocation0]]
  $region61: #{tpu_custom_call.1} parent=0
    _
  %s8 = ssub.s32 1, %s6
  %s9 = scalar_select 0, %s8, %s6
  %10 = sst [smem:[#allocation2]] %s4
  $region1: #{tpu_custom_call.1} parent=0
    #allocation3 [shape = 'u8[16384]{0}', space=vmem, size = 0x4000, scoped, tag = 'input window, operand 0']
    #allocation4 [shape = 's32[2]{0}', space=sflag, size = 0x8, scoped, tag = 'scoped memory for tpu_custom_call.1']
    #allocation5 [shape = 'u8[16384]{0}', space=vmem, size = 0x4000, scoped, tag = 'input window, operand 1']
    #allocation6 [shape = 's32[2]{0}', space=sflag, size = 0x8, scoped, tag = 'scoped memory for tpu_custom_call.1']
    %11 = vsyncpa [#allocation4], 0
    %s12 = scalar_lea.sflag [#allocation4], 1
    %13 = vsyncpa %s12, 0
    %14 = vsyncpa [#allocation6], 0
    %s15 = scalar_lea.sflag [#allocation6], 1
    %16 = vsyncpa %s15, 0
    loop: start=0, step=1, limit=4
    $region2: #{tpu_custom_call.1} parent=1 // loop_pre_header
      _
    $region3: #{tpu_custom_call.1} parent=1 // loop_header
      %s18 = sphi 0, %s22
      %p19 = scmp.ge.s32.totalorder %s18, 4
      %s28 = sphi 0, %s30
      %s31 = sphi 0, %s28
      %s32 = sphi 0, %s31
      %s48 = sphi 0, %s32
      %s54 = sphi 0, %s56
      %s57 = sphi 0, %s54
      %s58 = sphi 0, %s57
      %s74 = sphi 0, %s58
      %s80 = sphi 0, %s82
      %s83 = sphi 0, %s80
      %s84 = sphi 0, %s83
      %s100 = sphi 0, %s84
      %s104 = sphi 0, %s104
      %s106 = sphi 0, %s104
      %s107 = sphi 0, %s106
      %s121 = sphi 0, %s107
      %s125 = sphi 0, %s125
      %s127 = sphi 0, %s125
      %s128 = sphi 0, %s127
      %s142 = sphi 0, %s128
      %s148 = sphi 0, %s150
      %s151 = sphi 0, %s148
      %s152 = sphi 0, %s151
      %s168 = sphi 0, %s152
    $region4: #{tpu_custom_call.1} parent=1 // loop_header_branch
      %21 = sbr.rel (%p19) target = $region8
    $region5: #{tpu_custom_call.1} parent=1 // loop_body
      %s23 = ssub.s32 %s18, 1
      %s24 = ssub.s32 %s18, 2
      %s25 = sadd.s32 %s18, 1
      %s26 = ssub.s32 %s18, %s25
      %p27 = scmp.eq.s32.totalorder %s26, 0
      %s29 = sadd.s32 %s28, 1
      %s30 = scalar_select %p27, %s28, %s29
      %p33 = pneg %p27
      %p34 = scmp.eq.s32.totalorder %s18, 1
      %p35 = por %p33, %p34
      %p36 = scmp.ne.s32.totalorder %s28, %s31
      %p37 = scmp.eq.s32.totalorder %s18, 0
      %p38 = por %p36, %p37
      %p39 = scmp.ne.s32.totalorder %s28, %s31
      %p40 = scmp.eq.s32.totalorder %s23, 1
      %p41 = por %p39, %p40
      %p42 = scmp.ne.s32.totalorder %s31, %s32
      %p43 = scmp.eq.s32.totalorder %s23, 0
      %p44 = por %p42, %p43
      %p45 = scmp.ne.s32.totalorder %s31, %s32
      %p46 = scmp.eq.s32.totalorder %s24, 1
      %p47 = por %p45, %p46
      %p49 = scmp.ne.s32.totalorder %s32, %s48
      %p50 = scmp.eq.s32.totalorder %s24, 0
      %p51 = por %p49, %p50
      %s52 = ssub.s32 %s18, %s25
      %p53 = scmp.eq.s32.totalorder %s52, 0
      %s55 = sadd.s32 %s54, 1
      %s56 = scalar_select %p53, %s54, %s55
      %p59 = pneg %p53
      %p60 = scmp.eq.s32.totalorder %s18, 1
      %p61 = por %p59, %p60
      %p62 = scmp.ne.s32.totalorder %s54, %s57
      %p63 = scmp.eq.s32.totalorder %s18, 0
      %p64 = por %p62, %p63
      %p65 = scmp.ne.s32.totalorder %s54, %s57
      %p66 = scmp.eq.s32.totalorder %s23, 1
      %p67 = por %p65, %p66
      %p68 = scmp.ne.s32.totalorder %s57, %s58
      %p69 = scmp.eq.s32.totalorder %s23, 0
      %p70 = por %p68, %p69
      %p71 = scmp.ne.s32.totalorder %s57, %s58
      %p72 = scmp.eq.s32.totalorder %s24, 1
      %p73 = por %p71, %p72
      %p75 = scmp.ne.s32.totalorder %s58, %s74
      %p76 = scmp.eq.s32.totalorder %s24, 0
      %p77 = por %p75, %p76
      %s78 = ssub.s32 %s18, %s25
      %p79 = scmp.eq.s32.totalorder %s78, 0
      %s81 = sadd.s32 %s80, 1
      %s82 = scalar_select %p79, %s80, %s81
      %p85 = pneg %p79
      %p86 = scmp.eq.s32.totalorder %s18, 1
      %p87 = por %p85, %p86
      %p88 = scmp.ne.s32.totalorder %s80, %s83
      %p89 = scmp.eq.s32.totalorder %s18, 0
      %p90 = por %p88, %p89
      %p91 = scmp.ne.s32.totalorder %s80, %s83
      %p92 = scmp.eq.s32.totalorder %s23, 1
      %p93 = por %p91, %p92
      %p94 = scmp.ne.s32.totalorder %s83, %s84
      %p95 = scmp.eq.s32.totalorder %s23, 0
      %p96 = por %p94, %p95
      %p97 = scmp.ne.s32.totalorder %s83, %s84
      %p98 = scmp.eq.s32.totalorder %s24, 1
      %p99 = por %p97, %p98
      %p101 = scmp.ne.s32.totalorder %s84, %s100
      %p102 = scmp.eq.s32.totalorder %s24, 0
      %p103 = por %p101, %p102
      %s105 = sadd.s32 %s104, 1
      %p108 = scmp.eq.s32.totalorder %s18, 1
      %p109 = scmp.ne.s32.totalorder %s104, %s106
      %p110 = scmp.eq.s32.totalorder %s18, 0
      %p111 = por %p109, %p110
      %p112 = scmp.ne.s32.totalorder %s104, %s106
      %p113 = scmp.eq.s32.totalorder %s23, 1
      %p114 = por %p112, %p113
      %p115 = scmp.ne.s32.totalorder %s106, %s107
      %p116 = scmp.eq.s32.totalorder %s23, 0
      %p117 = por %p115, %p116
      %p118 = scmp.ne.s32.totalorder %s106, %s107
      %p119 = scmp.eq.s32.totalorder %s24, 1
      %p120 = por %p118, %p119
      %p122 = scmp.ne.s32.totalorder %s107, %s121
      %p123 = scmp.eq.s32.totalorder %s24, 0
      %p124 = por %p122, %p123
      %s126 = sadd.s32 %s125, 1
      %p129 = scmp.eq.s32.totalorder %s18, 1
      %p130 = scmp.ne.s32.totalorder %s125, %s127
      %p131 = scmp.eq.s32.totalorder %s18, 0
      %p132 = por %p130, %p131
      %p133 = scmp.ne.s32.totalorder %s125, %s127
      %p134 = scmp.eq.s32.totalorder %s23, 1
      %p135 = por %p133, %p134
      %p136 = scmp.ne.s32.totalorder %s127, %s128
      %p137 = scmp.eq.s32.totalorder %s23, 0
      %p138 = por %p136, %p137
      %p139 = scmp.ne.s32.totalorder %s127, %s128
      %p140 = scmp.eq.s32.totalorder %s24, 1
      %p141 = por %p139, %p140
      %p143 = scmp.ne.s32.totalorder %s128, %s142
      %p144 = scmp.eq.s32.totalorder %s24, 0
      %p145 = por %p143, %p144
      %s146 = ssub.s32 %s18, %s25
      %p147 = scmp.eq.s32.totalorder %s146, 0
      %s149 = sadd.s32 %s148, 1
      %s150 = scalar_select %p147, %s148, %s149
      %p153 = pneg %p147
      %p154 = scmp.eq.s32.totalorder %s18, 1
      %p155 = por %p153, %p154
      %p156 = scmp.ne.s32.totalorder %s148, %s151
      %p157 = scmp.eq.s32.totalorder %s18, 0
      %p158 = por %p156, %p157
      %p159 = scmp.ne.s32.totalorder %s148, %s151
      %p160 = scmp.eq.s32.totalorder %s23, 1
      %p161 = por %p159, %p160
      %p162 = scmp.ne.s32.totalorder %s151, %s152
      %p163 = scmp.eq.s32.totalorder %s23, 0
      %p164 = por %p162, %p163
      %p165 = scmp.ne.s32.totalorder %s151, %s152
      %p166 = scmp.eq.s32.totalorder %s24, 1
      %p167 = por %p165, %p166
      %p169 = scmp.ne.s32.totalorder %s152, %s168
      %p170 = scmp.eq.s32.totalorder %s24, 0
      %p171 = por %p169, %p170
      %p172 = scmp.le.s32.totalorder 1, %s18
      %p173 = scmp.lt.s32.totalorder %s18, 3
      %p174 = pnand %p172, %p173
      %p175 = pneg %p174
      // Predicated region
      $region9: #{tpu_custom_call.1} parent=5 // pred_check
        _
      $region10: #{tpu_custom_call.1} parent=5 // pred_check_branch
        %177 = sbr.rel (%p174) target = $region12
      $region11: #{tpu_custom_call.1} parent=5 // pred_region
        %s178 = ssub.s32 %s18, 1
        // Predicated region
        $region13: #{tpu_custom_call.1} parent=11 // pred_check
          %p179 = pneg %p117
        $region14: #{tpu_custom_call.1} parent=11 // pred_check_branch
          %181 = sbr.rel (%p179) target = $region16
        $region15: #{tpu_custom_call.1} parent=11 // pred_region
          _
        $region16: #{tpu_custom_call.1} parent=11 // pred_fallthru
          _
        // Predicated region
        $region17: #{tpu_custom_call.1} parent=11 // pred_check
          %p182 = pneg %p138
        $region18: #{tpu_custom_call.1} parent=11 // pred_check_branch
          %184 = sbr.rel (%p182) target = $region20
        $region19: #{tpu_custom_call.1} parent=11 // pred_region
          _
        $region20: #{tpu_custom_call.1} parent=11 // pred_fallthru
          _
      $region12: #{tpu_custom_call.1} parent=5 // pred_fallthru
        _
      %p185 = scmp.lt.s32.totalorder %s18, 2
      // Predicated region
      $region21: #{tpu_custom_call.1} parent=5 // pred_check
        %p186 = pneg %p185
      $region22: #{tpu_custom_call.1} parent=5 // pred_check_branch
        %188 = sbr.rel (%p186) target = $region24
      $region23: #{tpu_custom_call.1} parent=5 // pred_region
        // Predicated region
        $region25: #{tpu_custom_call.1} parent=23 // pred_check
          %p189 = pneg %p38
        $region26: #{tpu_custom_call.1} parent=23 // pred_check_branch
          %191 = sbr.rel (%p189) target = $region28
        $region27: #{tpu_custom_call.1} parent=23 // pred_region
          %s192 = sand.u32 %s28, 1
          %s193 = scalar_lea.sflag [#allocation4], %s192
          %s194 = sand.u32 %s28, 1
          %s195 = smul.addr %s194, 16
          %s196 = scalar_lea.vmem [#allocation3], %s195
          %s198 = ssub.s32 256, 256
          %199 = vsyncadd %s193, %s198
          %s200 = smul.addr %s18, 2
          %s201 = smul.addr %s200, 128
          %s202 = scalar_lea.hbm %s0, %s201
          %s204 = sshll.u32 %s196, 4
          %s205 = int_to_ptr.vmem [resolvable:$true] %s204
          %207 = dma.hbm_to_vmem [thread:$0]  %s202, 256, %s205, %s193
        $region28: #{tpu_custom_call.1} parent=23 // pred_fallthru
          _
        // Predicated region
        $region29: #{tpu_custom_call.1} parent=23 // pred_check
          %p208 = pneg %p64
        $region30: #{tpu_custom_call.1} parent=23 // pred_check_branch
          %210 = sbr.rel (%p208) target = $region32
        $region31: #{tpu_custom_call.1} parent=23 // pred_region
          %s211 = sand.u32 %s54, 1
          %s212 = scalar_lea.sflag [#allocation6], %s211
          %s213 = sand.u32 %s54, 1
          %s214 = smul.addr %s213, 16
          %s215 = scalar_lea.vmem [#allocation5], %s214
          %s217 = ssub.s32 256, 256
          %218 = vsyncadd %s212, %s217
          %s219 = smul.addr %s18, 2
          %s220 = smul.addr %s219, 128
          %s221 = scalar_lea.hbm %s1, %s220
          %s223 = sshll.u32 %s215, 4
          %s224 = int_to_ptr.vmem [resolvable:$true] %s223
          %226 = dma.hbm_to_vmem [thread:$0]  %s221, 256, %s224, %s212
        $region32: #{tpu_custom_call.1} parent=23 // pred_fallthru
          _
        // Predicated region
        $region33: #{tpu_custom_call.1} parent=23 // pred_check
          %p227 = pneg %p90
        $region34: #{tpu_custom_call.1} parent=23 // pred_check_branch
          %229 = sbr.rel (%p227) target = $region36
        $region35: #{tpu_custom_call.1} parent=23 // pred_region
          %p230 = scmp.lt.s32.totalorder %s18, 1
          %s231 = scalar_select %p230, %s18, 1
          %s232 = smul.addr %s231, 8
          %s233 = scalar_lea.vmem %s2, %s232
        $region36: #{tpu_custom_call.1} parent=23 // pred_fallthru
          _
      $region24: #{tpu_custom_call.1} parent=5 // pred_fallthru
        _
      %p234 = scmp.le.s32.totalorder 1, %s18
      %p235 = scmp.lt.s32.totalorder %s18, 3
      %p236 = pnand %p234, %p235
      %p237 = pneg %p236
      // Predicated region
      $region37: #{tpu_custom_call.1} parent=5 // pred_check
        _
      $region38: #{tpu_custom_call.1} parent=5 // pred_check_branch
        %239 = sbr.rel (%p236) target = $region40
      $region39: #{tpu_custom_call.1} parent=5 // pred_region
        %s240 = ssub.s32 %s18, 1
        %s241 = sand.u32 %s31, 1
        %s242 = scalar_lea.sflag [#allocation4], %s241
        %s243 = sand.u32 %s31, 1
        %s244 = smul.addr %s243, 16
        %s245 = scalar_lea.vmem [#allocation3], %s244
        // Predicated region
        $region41: #{tpu_custom_call.1} parent=39 // pred_check
          %p246 = pneg %p44
        $region42: #{tpu_custom_call.1} parent=39 // pred_check_branch
          %248 = sbr.rel (%p246) target = $region44
        $region43: #{tpu_custom_call.1} parent=39 // pred_region
          %249 = dma.done %s242, 256
        $region44: #{tpu_custom_call.1} parent=39 // pred_fallthru
          _
        %s250 = sand.u32 %s57, 1
        %s251 = scalar_lea.sflag [#allocation6], %s250
        %s252 = sand.u32 %s57, 1
        %s253 = smul.addr %s252, 16
        %s254 = scalar_lea.vmem [#allocation5], %s253
        // Predicated region
        $region45: #{tpu_custom_call.1} parent=39 // pred_check
          %p255 = pneg %p70
        $region46: #{tpu_custom_call.1} parent=39 // pred_check_branch
          %257 = sbr.rel (%p255) target = $region48
        $region47: #{tpu_custom_call.1} parent=39 // pred_region
          %258 = dma.done %s251, 256
        $region48: #{tpu_custom_call.1} parent=39 // pred_fallthru
          _
        %s259 = sand.u32 %s31, 1
        %s260 = scalar_lea.sflag [#allocation4], %s259
        %s261 = sand.u32 %s31, 1
        %s262 = smul.addr %s261, 16
        %s263 = scalar_lea.vmem [#allocation3], %s262
        %p264 = pneg %p44
        %p265 = pneg %p41
        %s266 = sand.u32 %s57, 1
        %s267 = scalar_lea.sflag [#allocation6], %s266
        %s268 = sand.u32 %s57, 1
        %s269 = smul.addr %s268, 16
        %s270 = scalar_lea.vmem [#allocation5], %s269
        %p271 = pneg %p70
        %p272 = pneg %p67
        %p273 = scmp.lt.s32.totalorder %s23, 1
        %s274 = scalar_select %p273, %s23, 1
        %s275 = smul.addr %s274, 8
        %s276 = scalar_lea.vmem %s2, %s275
        %p277 = pneg %p96
        %p278 = pneg %p93
        %p279 = pneg %p117
        %p280 = pneg %p114
        %p281 = pneg %p138
        %p282 = pneg %p135
        %p283 = pneg %p164
        %p284 = pneg %p161
        %p285 = scmp.lt.s32.totalorder %s23, 1
        %s286 = scalar_select %p285, %s23, 1
        %s287 = smul.addr %s286, 8
        %s288 = scalar_lea.vmem %s5, %s287
        %p289 = scmp.lt.s32.totalorder %s23, 1
        %s290 = scalar_select %p289, %s23, 1
        %s291 = smul.addr %s290, 8
        %s292 = scalar_lea.vmem %s2, %s291
        %p293 = scmp.lt.s32.totalorder %s23, 1
        %s294 = scalar_select %p293, %s23, 1
        %s295 = smul.addr %s294, 8
        %s296 = scalar_lea.vmem %s5, %s295
        %v297 = vld [vmem:[%s245] sm:$0xff]
        %v298 = vld [vmem:[%s254] sm:$0xff]
        %v299 = vsub.f32 %v297, %v298
        %v300 = vmul.f32 %v299, %v299
        %302 = vrot.lane.b32.xlu0 %v300, 96
        %v303 = vpop.permute.xlu0 %302
        %v305 = vadd.f32 %v300, %v303
        %306 = vrot.lane.b32.xlu0 %v300, 64
        %v307 = vpop.permute.xlu0 %306
        %v309 = vadd.f32 %v305, %v307
        %310 = vrot.lane.b32.xlu0 %v300, 32
        %v311 = vpop.permute.xlu0 %310
        %v313 = vadd.f32 %v309, %v311
        %v314 = vld [vmem:[%s245 + $0x8] sm:$0xff]
        %v315 = vld [vmem:[%s254 + $0x8] sm:$0xff]
        %v316 = vsub.f32 %v314, %v315
        %v317 = vmul.f32 %v316, %v316
        %v318 = vadd.f32 %v313, %v317
        %320 = vrot.lane.b32.xlu0 %v317, 96
        %v321 = vpop.permute.xlu0 %320
        %v323 = vadd.f32 %v318, %v321
        %324 = vrot.lane.b32.xlu0 %v317, 64
        %v325 = vpop.permute.xlu0 %324
        %v327 = vadd.f32 %v323, %v325
        %328 = vrot.lane.b32.xlu0 %v317, 32
        %v329 = vpop.permute.xlu0 %328
        %v331 = vadd.f32 %v327, %v329
        %v332 = vrsqrt.pop %v331
        %v333 = vmul.f32 %v331, %v332
        %vm334 = vcmp.eq.f32.partialorder %v331, inf
        %v335 = vsel %vm334, %v331, %v333
        %vm336 = vcmp.eq.f32.partialorder %v331, 0.0
        %v337 = vand.u32 %v331, 2147483648
        %v338 = vsel %vm336, %v337, %v335
        %v339 = vld [vmem:[%s3] sm:$0x1]
        %v341 = vlaneseq
        %v342 = vshrl.u32 %v341, 7
        %v343 = vsub.s32 0, %v342
        %v344 = vrot.slane %v339, %v343
        %v346 = vmul.f32 %v338, %v344
        %vm347 = vcmask 261120
        %v348 = vsel %vm347, %v346, 0.0
        %349 = vadd.xlane.f32.xlu0 %v348
        %v350 = vpop.xlane.xlu0 %349
        %s351 = sld [smem:[#allocation2]]
        %v352 = vstv %s351
        %v353 = vadd.f32 %v350, %v352
        %v354 = vld [vmem:[%s292] sm:$0xff]
        %v355 = vmax.f32 %v353, 0.0
        %v356 = vmul.f32 %v353, %v354
        %v357 = vsub.f32 %v355, %v356
        %v358 = vand.u32 2147483647, %v353
        %v359 = vsub.f32 0.0, %v358
        %v360 = vmul.f32 %v359, 1.442695
        %v361 = vpow.pop %v360
        %v362 = vadd.f32 %v361, 1.0
        %v363 = vlog2.pop %v362
        %v364 = vmul.f32 %v363, 0.6931472
        %v365 = vmul.f32 -0.5, %v361
        %v366 = vadd.f32 %v365, 1.0
        %v367 = vmul.f32 %v366, %v361
        %v368 = vand.u32 2147483647, %v361
        %vm369 = vcmp.lt.f32.partialorder %v368, 0.0004427343
        %v370 = vsel %vm369, %v367, %v364
        %v371 = vadd.f32 %v357, %v370
        %vm372 = vcmask 7168
        %373 = vst.msk [vmem:[%s296] sm:$0xff] %vm372, %v371
        %p374 = scmp.lt.s32.totalorder %s23, 1
        %s375 = scalar_select %p374, %s23, 1
        %s376 = smul.addr %s375, 8
        %s377 = scalar_lea.vmem %s5, %s376
        // Predicated region
        $region49: #{tpu_custom_call.1} parent=39 // pred_check
          %p378 = pneg %p161
        $region50: #{tpu_custom_call.1} parent=39 // pred_check_branch
          %380 = sbr.rel (%p378) target = $region52
        $region51: #{tpu_custom_call.1} parent=39 // pred_region
          _
        $region52: #{tpu_custom_call.1} parent=39 // pred_fallthru
          _
      $region40: #{tpu_custom_call.1} parent=5 // pred_fallthru
        _
      %p381 = scmp.le.s32.totalorder 2, %s18
      // Predicated region
      $region53: #{tpu_custom_call.1} parent=5 // pred_check
        %p382 = pneg %p381
      $region54: #{tpu_custom_call.1} parent=5 // pred_check_branch
        %384 = sbr.rel (%p382) target = $region56
      $region55: #{tpu_custom_call.1} parent=5 // pred_region
        %s385 = ssub.s32 %s18, 2
        // Predicated region
        $region57: #{tpu_custom_call.1} parent=55 // pred_check
          %p386 = pneg %p167
        $region58: #{tpu_custom_call.1} parent=55 // pred_check_branch
          %388 = sbr.rel (%p386) target = $region60
        $region59: #{tpu_custom_call.1} parent=55 // pred_region
          %p389 = scmp.lt.s32.totalorder %s24, 1
          %s390 = scalar_select %p389, %s24, 1
          %s391 = smul.addr %s390, 8
          %s392 = scalar_lea.vmem %s5, %s391
        $region60: #{tpu_custom_call.1} parent=55 // pred_fallthru
          _
      $region56: #{tpu_custom_call.1} parent=5 // pred_fallthru
        _
    $region6: #{tpu_custom_call.1} parent=1 // loop_footer
      %s22 = sadd.s32 1, %s18
    $region7: #{tpu_custom_call.1} parent=1 // loop_footer_branch
      %17 = sbr.rel target = $region3
    $region8: #{tpu_custom_call.1} parent=1 // loop_exit
      _
    %393 = vsyncpa [#allocation4], 1
    %s394 = scalar_lea.sflag [#allocation4], 1
    %395 = vsyncpa %s394, 1
    %396 = vsyncpa [#allocation6], 1
    %s397 = scalar_lea.sflag [#allocation6], 1
    %398 = vsyncpa %s397, 1

</llo_original>
